<compile_context>
chip_gen: v7x
topology: tpu7x:2x2x1
jax: 0.10.0
libtpu: 0.0.40
codegen_flags: <defaults>
</compile_context>

<pallas_src>
import jax
import jax.numpy as jnp
from jax.experimental import pallas as pl
from jax.experimental.pallas import tpu as pltpu


def _round_up(x, m):
    return ((x + m - 1) // m) * m


def _physical_vmem_bytes():
    try:
        return int(pltpu.get_tpu_info().vmem_capacity_bytes)
    except Exception:
        return 64 << 20  # conservative (v7x per-TC); v5e/v6e have 128 MiB


def _fusion_kernel(x_ref, g_ref, w1x_ref, w1g_ref, b1_ref, w2_ref, b2_ref, o_ref):
    """out = relu(x @ W1x + g @ W1g + b1) @ W2 + b2 for one (TM, Dp) row tile."""
    cdt = w1x_ref.dtype
    # Cast activations to the MXU dtype at the operand boundary (VPU work hidden
    # under MXU); accumulate in f32.
    h = jnp.dot(x_ref[...].astype(cdt), w1x_ref[...],
                preferred_element_type=jnp.float32)
    h = h + jnp.dot(g_ref[...].astype(cdt), w1g_ref[...],
                    preferred_element_type=jnp.float32)
    h = h + b1_ref[...]                 # f32 bias, (1, Dp) broadcast over rows
    h = jnp.maximum(h, 0.0)             # ReLU in f32 (VPU)
    out = jnp.dot(h.astype(cdt), w2_ref[...],
                  preferred_element_type=jnp.float32)
    out = out + b2_ref[...]
    o_ref[...] = out.astype(o_ref.dtype)


def concat_fusion_forward(x, g, params, *, use_bf16=True, out_dtype=None):
    """x, g: [batch, seq, D]. Returns [batch, seq, D] (same dtype as x by default)."""
    w1, b1, w2, b2 = params["w1"], params["b1"], params["w2"], params["b2"]
    B, S, D = x.shape
    M = B * S
    out_dtype = x.dtype if out_dtype is None else out_dtype
    compute_dtype = jnp.bfloat16 if use_bf16 else jnp.float32

    Dp = _round_up(D, 128)                       # lane-dense width
    csize = jnp.dtype(compute_dtype).itemsize
    out_csize = jnp.dtype(out_dtype).itemsize

    vmem_physical = _physical_vmem_bytes()
    vmem_cap = int(vmem_physical * 0.85)         # leave headroom for Mosaic scratch

    # Resident (single-buffered) weight footprint; guard the weight-resident regime.
    weight_bytes = 3 * Dp * Dp * csize + 2 * Dp * 4
    if weight_bytes + (8 << 20) > vmem_cap:
        # TODO(synk): implement the K-tiled fallback (weights via pl.ANY or a
        # (Dp, TK)/(TK, Dp) "arbitrary" reduction axis + f32 accumulator scratch).
        raise NotImplementedError(
            f"embedding_dim={D}: {weight_bytes / 2**20:.1f} MiB of resident weights "
            f"exceeds the {vmem_cap / 2**20:.0f} MiB VMEM budget; K-tiled path needed.")

    # ---- adaptive row tile -------------------------------------------------
    # Target >= ~4 MiB of activation+output HBM bytes per grid step so the
    # ~0.35us per-step pipeline overhead is amortized; clamp by VMEM budget.
    in_csize_est = 4                              # activations fed as f32 (worst case)
    per_row_hbm = Dp * (2 * in_csize_est + out_csize)
    per_row_vmem = Dp * (2 * 2 * in_csize_est     # x, g tiles double-buffered
                         + 2 * out_csize          # out tile double-buffered
                         + 4 + 3 * csize)         # f32 h + casts of x/g/h
    tm_budget = max(8, (vmem_cap - weight_bytes - (4 << 20)) // per_row_vmem)
    tm_target = max(256, (4 << 20) // per_row_hbm)
    TM = int(min(tm_target, tm_budget, 2048, _round_up(M, 8)))
    # Multiples of 256 keep 2x256x256 MXU passes full (v6e/v7x); 8 = sublane floor.
    TM = _round_up(TM, 256) if TM >= 256 else _round_up(TM, 8)
    Mp = _round_up(M, TM)
    grid = (Mp // TM,)

    # ---- wrapper-side layout prep -------------------------------------------
    x2 = x.reshape(M, D)
    g2 = g.reshape(M, D)
    need_pad = (Dp != D) or (Mp != M)
    if need_pad:
        # Padding forces a copy anyway -> pre-cast so the padded copy is half width.
        x2 = jnp.pad(x2, ((0, Mp - M), (0, Dp - D))).astype(compute_dtype)
        g2 = jnp.pad(g2, ((0, Mp - M), (0, Dp - D))).astype(compute_dtype)
    # else: feed f32 straight in; the kernel casts at the MXU boundary, avoiding a
    # wrapper-side pad/cast HBM round-trip entirely.
    in_csize = jnp.dtype(x2.dtype).itemsize

    # PyTorch Linear: y = x @ W^T + b with W: [out, in].  Fold the concat by
    # splitting W1 ([D, 2D]) into x- and g-halves, pre-transpose, zero-pad.
    w1x = jnp.pad(w1[:, :D].T, ((0, Dp - D), (0, Dp - D))).astype(compute_dtype)
    w1g = jnp.pad(w1[:, D:].T, ((0, Dp - D), (0, Dp - D))).astype(compute_dtype)
    w2t = jnp.pad(w2.T, ((0, Dp - D), (0, Dp - D))).astype(compute_dtype)
    b1r = jnp.pad(b1, (0, Dp - D)).reshape(1, Dp).astype(jnp.float32)
    b2r = jnp.pad(b2, (0, Dp - D)).reshape(1, Dp).astype(jnp.float32)

    cost = pl.CostEstimate(
        flops=2 * Mp * Dp * (2 * Dp) + 2 * Mp * Dp * Dp,
        transcendentals=0,
        bytes_accessed=(2 * Mp * Dp * in_csize      # x, g
                        + 3 * Dp * Dp * csize       # weights
                        + 2 * Dp * 4                # biases
                        + Mp * Dp * out_csize),     # output
    )

    def _call(single_buffer_weights):
        w_buf = 1 if single_buffer_weights else 2

        def resident_spec(shape):
            idx = lambda i, _s=shape: (0,) * len(_s)
            if single_buffer_weights:
                return pl.BlockSpec(shape, idx, pipeline_mode=pl.Buffered(1))
            return pl.BlockSpec(shape, idx)

        # Honest VMEM accounting: buffered weights, double-buffered activation
        # tiles, the f32 h intermediate and the bf16 cast copies of x/g/h.
        vmem_needed = (
            w_buf * (3 * Dp * Dp * csize + 2 * Dp * 4)
            + 2 * 2 * TM * Dp * in_csize
            + 2 * TM * Dp * out_csize
            + TM * Dp * 4 + 3 * TM * Dp * csize
        )
        vmem_limit = int(min(max(int(1.25 * vmem_needed) + (2 << 20), 16 << 20),
                             vmem_cap))

        return pl.pallas_call(
            _fusion_kernel,
            out_shape=jax.ShapeDtypeStruct((Mp, Dp), out_dtype),
            grid=grid,
            in_specs=[
                pl.BlockSpec((TM, Dp), lambda i: (i, 0)),   # x tile
                pl.BlockSpec((TM, Dp), lambda i: (i, 0)),   # g tile
                resident_spec((Dp, Dp)),                    # W1x^T (resident)
                resident_spec((Dp, Dp)),                    # W1g^T (resident)
                resident_spec((1, Dp)),                     # b1    (resident)
                resident_spec((Dp, Dp)),                    # W2^T  (resident)
                resident_spec((1, Dp)),                     # b2    (resident)
            ],
            out_specs=pl.BlockSpec((TM, Dp), lambda i: (i, 0)),
            compiler_params=pltpu.CompilerParams(
                # Megacore sharding of the M axis on v7x; measured no-op on v5e/v6e.
                dimension_semantics=("parallel",),
                vmem_limit_bytes=vmem_limit,
            ),
            cost_estimate=cost,
        )(x2, g2, w1x, w1g, b1r, w2t, b2r)

    try:
        out = _call(single_buffer_weights=True)
    except Exception:
        # Older Pallas without single-buffer pipeline_mode support: fall back to
        # default double-buffered resident weights (correct, just more VMEM).
        out = _call(single_buffer_weights=False)

    if need_pad:
        out = out[:M, :D]
    return out.reshape(B, S, D)


def init_params(key, embedding_dim):
    """Deterministic init mirroring nn.Linear default (uniform +-1/sqrt(fan_in))."""
    D = embedding_dim
    k1, k2, k3, k4 = jax.random.split(key, 4)
    bound1 = 1.0 / jnp.sqrt(2.0 * D)
    bound2 = 1.0 / jnp.sqrt(1.0 * D)
    return {
        "w1": jax.random.uniform(k1, (D, 2 * D), jnp.float32, -bound1, bound1),
        "b1": jax.random.uniform(k2, (D,), jnp.float32, -bound1, bound1),
        "w2": jax.random.uniform(k3, (D, D), jnp.float32, -bound2, bound2),
        "b2": jax.random.uniform(k4, (D,), jnp.float32, -bound2, bound2),
    }


if __name__ == "__main__":
    batch, seq, embedding_dim = 2, 8, 32

    key = jax.random.PRNGKey(0)
    kx, kg, kp = jax.random.split(key, 3)

    x = jax.random.normal(kx, (batch, seq, embedding_dim), jnp.float32)
    g = jax.random.normal(kg, (batch, seq, embedding_dim), jnp.float32)
    params = init_params(kp, embedding_dim)

    # Pure-JAX f32 reference.
    cat = jnp.concatenate([x, g], axis=-1)
    h_ref = jnp.maximum(cat @ params["w1"].T + params["b1"], 0.0)
    ref = h_ref @ params["w2"].T + params["b2"]

    # f32 parity path (tight tolerance).
    out_f32 = jax.block_until_ready(
        concat_fusion_forward(x, g, params, use_bf16=False))
    assert out_f32.shape == (batch, seq, embedding_dim)
    assert jnp.allclose(out_f32, ref, atol=2e-3, rtol=2e-3), (
        f"f32 max abs err {jnp.max(jnp.abs(out_f32 - ref))}")

    # bf16 MXU path (production path; bf16-appropriate tolerance).
    out_bf16 = jax.block_until_ready(
        concat_fusion_forward(x, g, params, use_bf16=True))
    assert out_bf16.shape == (batch, seq, embedding_dim)
    assert jnp.allclose(out_bf16, ref, atol=5e-2, rtol=5e-2), (
        f"bf16 max abs err {jnp.max(jnp.abs(out_bf16 - ref))}")

    print("KERNEL_OK")
</pallas_src>

<mosaic_0001>
module attributes {stable_mosaic.version = 11 : i64} {
  func.func @_fusion_kernel(%arg0: i32, %arg1: memref<16x128xf32, #tpu.memory_space<vmem>>, %arg2: memref<16x128xf32, #tpu.memory_space<vmem>>, %arg3: memref<128x128xf32, #tpu.memory_space<vmem>>, %arg4: memref<128x128xf32, #tpu.memory_space<vmem>>, %arg5: memref<1x128xf32, #tpu.memory_space<vmem>>, %arg6: memref<128x128xf32, #tpu.memory_space<vmem>>, %arg7: memref<1x128xf32, #tpu.memory_space<vmem>>, %arg8: memref<16x128xf32, #tpu.memory_space<vmem>>) attributes {dimension_semantics = [#tpu.dimension_semantics<parallel>], iteration_bounds = array<i64: 1>, scalar_prefetch = 0 : i64, scratch_operands = 0 : i64, tpu.core_type = #tpu.core_type<tc>, window_params = [{transform_indices = @transform_0, window_bounds = array<i64: 16, 128>}, {transform_indices = @transform_1, window_bounds = array<i64: 16, 128>}, {pipeline_mode = #tpu.pipeline_mode<synchronous>, transform_indices = @transform_2, window_bounds = array<i64: 128, 128>}, {pipeline_mode = #tpu.pipeline_mode<synchronous>, transform_indices = @transform_3, window_bounds = array<i64: 128, 128>}, {pipeline_mode = #tpu.pipeline_mode<synchronous>, transform_indices = @transform_4, window_bounds = array<i64: 1, 128>}, {pipeline_mode = #tpu.pipeline_mode<synchronous>, transform_indices = @transform_5, window_bounds = array<i64: 128, 128>}, {pipeline_mode = #tpu.pipeline_mode<synchronous>, transform_indices = @transform_6, window_bounds = array<i64: 1, 128>}, {transform_indices = @transform_7, window_bounds = array<i64: 16, 128>}]} {
    %c0 = arith.constant 0 : index
    %c0_0 = arith.constant 0 : index
    %0 = vector.load %arg1[%c0, %c0_0] : memref<16x128xf32, #tpu.memory_space<vmem>>, vector<16x128xf32>
    %c0_1 = arith.constant 0 : index
    %c0_2 = arith.constant 0 : index
    %1 = vector.load %arg3[%c0_1, %c0_2] : memref<128x128xf32, #tpu.memory_space<vmem>>, vector<128x128xf32>
    %cst = arith.constant dense<0.000000e+00> : vector<16x128xf32>
    %2 = tpu.matmul %0, %1, %cst {dimension_numbers = #tpu.dot_dimension_numbers<[1], [0], [0], [1], [0, 0, 1, 1], [], []>} : vector<16x128xf32>, vector<128x128xf32>, vector<16x128xf32> -> vector<16x128xf32>
    %c0_3 = arith.constant 0 : index
    %c0_4 = arith.constant 0 : index
    %3 = vector.load %arg2[%c0_3, %c0_4] : memref<16x128xf32, #tpu.memory_space<vmem>>, vector<16x128xf32>
    %c0_5 = arith.constant 0 : index
    %c0_6 = arith.constant 0 : index
    %4 = vector.load %arg4[%c0_5, %c0_6] : memref<128x128xf32, #tpu.memory_space<vmem>>, vector<128x128xf32>
    %cst_7 = arith.constant dense<0.000000e+00> : vector<16x128xf32>
    %5 = tpu.matmul %3, %4, %cst_7 {dimension_numbers = #tpu.dot_dimension_numbers<[1], [0], [0], [1], [0, 0, 1, 1], [], []>} : vector<16x128xf32>, vector<128x128xf32>, vector<16x128xf32> -> vector<16x128xf32>
    %6 = arith.addf %2, %5 : vector<16x128xf32>
    %c0_8 = arith.constant 0 : index
    %c0_9 = arith.constant 0 : index
    %7 = vector.load %arg5[%c0_8, %c0_9] : memref<1x128xf32, #tpu.memory_space<vmem>>, vector<1x128xf32>
    %8 = vector.broadcast %7 : vector<1x128xf32> to vector<16x128xf32>
    %9 = arith.addf %6, %8 : vector<16x128xf32>
    %cst_10 = arith.constant 0.000000e+00 : f32
    %10 = vector.broadcast %cst_10 : f32 to vector<16x128xf32>
    %11 = arith.maximumf %9, %10 : vector<16x128xf32>
    %c0_11 = arith.constant 0 : index
    %c0_12 = arith.constant 0 : index
    %12 = vector.load %arg6[%c0_11, %c0_12] : memref<128x128xf32, #tpu.memory_space<vmem>>, vector<128x128xf32>
    %cst_13 = arith.constant dense<0.000000e+00> : vector<16x128xf32>
    %13 = tpu.matmul %11, %12, %cst_13 {dimension_numbers = #tpu.dot_dimension_numbers<[1], [0], [0], [1], [0, 0, 1, 1], [], []>} : vector<16x128xf32>, vector<128x128xf32>, vector<16x128xf32> -> vector<16x128xf32>
    %c0_14 = arith.constant 0 : index
    %c0_15 = arith.constant 0 : index
    %14 = vector.load %arg7[%c0_14, %c0_15] : memref<1x128xf32, #tpu.memory_space<vmem>>, vector<1x128xf32>
    %15 = vector.broadcast %14 : vector<1x128xf32> to vector<16x128xf32>
    %16 = arith.addf %13, %15 : vector<16x128xf32>
    %c0_16 = arith.constant 0 : index
    %c0_17 = arith.constant 0 : index
    %17 = vector.load %arg8[%c0_16, %c0_17] : memref<16x128xf32, #tpu.memory_space<vmem>>, vector<16x128xf32>
    tpu.vector_store %arg8[%c0_16, %c0_17], %16 {strides = array<i32>} : memref<16x128xf32, #tpu.memory_space<vmem>>, vector<16x128xf32>,
    return
  }
  func.func @transform_0(%arg0: i32) -> (i32, i32) {
    %c0_i32 = arith.constant 0 : i32
    %c0_i32_0 = arith.constant 0 : i32
    return %arg0, %c0_i32 : i32, i32
  }
  func.func @transform_1(%arg0: i32) -> (i32, i32) {
    %c0_i32 = arith.constant 0 : i32
    %c0_i32_0 = arith.constant 0 : i32
    return %arg0, %c0_i32 : i32, i32
  }
  func.func @transform_2(%arg0: i32) -> (i32, i32) {
    %c0_i32 = arith.constant 0 : i32
    %c0_i32_0 = arith.constant 0 : i32
    %c0_i32_1 = arith.constant 0 : i32
    return %c0_i32, %c0_i32_0 : i32, i32
  }
  func.func @transform_3(%arg0: i32) -> (i32, i32) {
    %c0_i32 = arith.constant 0 : i32
    %c0_i32_0 = arith.constant 0 : i32
    %c0_i32_1 = arith.constant 0 : i32
    return %c0_i32, %c0_i32_0 : i32, i32
  }
  func.func @transform_4(%arg0: i32) -> (i32, i32) {
    %c0_i32 = arith.constant 0 : i32
    %c0_i32_0 = arith.constant 0 : i32
    %c0_i32_1 = arith.constant 0 : i32
    return %c0_i32, %c0_i32_0 : i32, i32
  }
  func.func @transform_5(%arg0: i32) -> (i32, i32) {
    %c0_i32 = arith.constant 0 : i32
    %c0_i32_0 = arith.constant 0 : i32
    %c0_i32_1 = arith.constant 0 : i32
    return %c0_i32, %c0_i32_0 : i32, i32
  }
  func.func @transform_6(%arg0: i32) -> (i32, i32) {
    %c0_i32 = arith.constant 0 : i32
    %c0_i32_0 = arith.constant 0 : i32
    %c0_i32_1 = arith.constant 0 : i32
    return %c0_i32, %c0_i32_0 : i32, i32
  }
  func.func @transform_7(%arg0: i32) -> (i32, i32) {
    %c0_i32 = arith.constant 0 : i32
    %c0_i32_0 = arith.constant 0 : i32
    return %arg0, %c0_i32 : i32, i32
  }
}

module attributes {stable_mosaic.version = 11 : i64} {
  func.func @_fusion_kernel(%arg0: i32, %arg1: memref<16x128xf32, #tpu.memory_space<vmem>>, %arg2: memref<16x128xf32, #tpu.memory_space<vmem>>, %arg3: memref<128x128xf32, #tpu.memory_space<vmem>>, %arg4: memref<128x128xf32, #tpu.memory_space<vmem>>, %arg5: memref<1x128xf32, #tpu.memory_space<vmem>>, %arg6: memref<128x128xf32, #tpu.memory_space<vmem>>, %arg7: memref<1x128xf32, #tpu.memory_space<vmem>>, %arg8: memref<16x128xf32, #tpu.memory_space<vmem>>) attributes {dimension_semantics = [#tpu.dimension_semantics<parallel>], iteration_bounds = array<i64: 1>, scalar_prefetch = 0 : i64, scratch_operands = 0 : i64, tpu.core_type = #tpu.core_type<tc>, window_params = [{transform_indices = @transform_0, window_bounds = array<i64: 16, 128>}, {transform_indices = @transform_1, window_bounds = array<i64: 16, 128>}, {pipeline_mode = #tpu.pipeline_mode<synchronous>, transform_indices = @transform_2, window_bounds = array<i64: 128, 128>}, {pipeline_mode = #tpu.pipeline_mode<synchronous>, transform_indices = @transform_3, window_bounds = array<i64: 128, 128>}, {pipeline_mode = #tpu.pipeline_mode<synchronous>, transform_indices = @transform_4, window_bounds = array<i64: 1, 128>}, {pipeline_mode = #tpu.pipeline_mode<synchronous>, transform_indices = @transform_5, window_bounds = array<i64: 128, 128>}, {pipeline_mode = #tpu.pipeline_mode<synchronous>, transform_indices = @transform_6, window_bounds = array<i64: 1, 128>}, {transform_indices = @transform_7, window_bounds = array<i64: 16, 128>}]} {
    %c0 = arith.constant 0 : index
    %c0_0 = arith.constant 0 : index
    %0 = vector.load %arg1[%c0, %c0_0] : memref<16x128xf32, #tpu.memory_space<vmem>>, vector<16x128xf32>
    %c0_1 = arith.constant 0 : index
    %c0_2 = arith.constant 0 : index
    %1 = vector.load %arg3[%c0_1, %c0_2] : memref<128x128xf32, #tpu.memory_space<vmem>>, vector<128x128xf32>
    %cst = arith.constant dense<0.000000e+00> : vector<16x128xf32>
    %2 = tpu.matmul %0, %1, %cst {dimension_numbers = #tpu.dot_dimension_numbers<[1], [0], [0], [1], [0, 0, 1, 1], [], []>} : vector<16x128xf32>, vector<128x128xf32>, vector<16x128xf32> -> vector<16x128xf32>
    %c0_3 = arith.constant 0 : index
    %c0_4 = arith.constant 0 : index
    %3 = vector.load %arg2[%c0_3, %c0_4] : memref<16x128xf32, #tpu.memory_space<vmem>>, vector<16x128xf32>
    %c0_5 = arith.constant 0 : index
    %c0_6 = arith.constant 0 : index
    %4 = vector.load %arg4[%c0_5, %c0_6] : memref<128x128xf32, #tpu.memory_space<vmem>>, vector<128x128xf32>
    %cst_7 = arith.constant dense<0.000000e+00> : vector<16x128xf32>
    %5 = tpu.matmul %3, %4, %cst_7 {dimension_numbers = #tpu.dot_dimension_numbers<[1], [0], [0], [1], [0, 0, 1, 1], [], []>} : vector<16x128xf32>, vector<128x128xf32>, vector<16x128xf32> -> vector<16x128xf32>
    %6 = arith.addf %2, %5 : vector<16x128xf32>
    %c0_8 = arith.constant 0 : index
    %c0_9 = arith.constant 0 : index
    %7 = vector.load %arg5[%c0_8, %c0_9] : memref<1x128xf32, #tpu.memory_space<vmem>>, vector<1x128xf32>
    %8 = vector.broadcast %7 : vector<1x128xf32> to vector<16x128xf32>
    %9 = arith.addf %6, %8 : vector<16x128xf32>
    %cst_10 = arith.constant 0.000000e+00 : f32
    %10 = vector.broadcast %cst_10 : f32 to vector<16x128xf32>
    %11 = arith.maximumf %9, %10 : vector<16x128xf32>
    %c0_11 = arith.constant 0 : index
    %c0_12 = arith.constant 0 : index
    %12 = vector.load %arg6[%c0_11, %c0_12] : memref<128x128xf32, #tpu.memory_space<vmem>>, vector<128x128xf32>
    %cst_13 = arith.constant dense<0.000000e+00> : vector<16x128xf32>
    %13 = tpu.matmul %11, %12, %cst_13 {dimension_numbers = #tpu.dot_dimension_numbers<[1], [0], [0], [1], [0, 0, 1, 1], [], []>} : vector<16x128xf32>, vector<128x128xf32>, vector<16x128xf32> -> vector<16x128xf32>
    %c0_14 = arith.constant 0 : index
    %c0_15 = arith.constant 0 : index
    %14 = vector.load %arg7[%c0_14, %c0_15] : memref<1x128xf32, #tpu.memory_space<vmem>>, vector<1x128xf32>
    %15 = vector.broadcast %14 : vector<1x128xf32> to vector<16x128xf32>
    %16 = arith.addf %13, %15 : vector<16x128xf32>
    %c0_16 = arith.constant 0 : index
    %c0_17 = arith.constant 0 : index
    %17 = vector.load %arg8[%c0_16, %c0_17] : memref<16x128xf32, #tpu.memory_space<vmem>>, vector<16x128xf32>
    tpu.vector_store %arg8[%c0_16, %c0_17], %16 {strides = array<i32>} : memref<16x128xf32, #tpu.memory_space<vmem>>, vector<16x128xf32>,
    return
  }
  func.func @transform_0(%arg0: i32) -> (i32, i32) {
    %c0_i32 = arith.constant 0 : i32
    %c0_i32_0 = arith.constant 0 : i32
    return %arg0, %c0_i32 : i32, i32
  }
  func.func @transform_1(%arg0: i32) -> (i32, i32) {
    %c0_i32 = arith.constant 0 : i32
    %c0_i32_0 = arith.constant 0 : i32
    return %arg0, %c0_i32 : i32, i32
  }
  func.func @transform_2(%arg0: i32) -> (i32, i32) {
    %c0_i32 = arith.constant 0 : i32
    %c0_i32_0 = arith.constant 0 : i32
    %c0_i32_1 = arith.constant 0 : i32
    return %c0_i32, %c0_i32_0 : i32, i32
  }
  func.func @transform_3(%arg0: i32) -> (i32, i32) {
    %c0_i32 = arith.constant 0 : i32
    %c0_i32_0 = arith.constant 0 : i32
    %c0_i32_1 = arith.constant 0 : i32
    return %c0_i32, %c0_i32_0 : i32, i32
  }
  func.func @transform_4(%arg0: i32) -> (i32, i32) {
    %c0_i32 = arith.constant 0 : i32
    %c0_i32_0 = arith.constant 0 : i32
    %c0_i32_1 = arith.constant 0 : i32
    return %c0_i32, %c0_i32_0 : i32, i32
  }
  func.func @transform_5(%arg0: i32) -> (i32, i32) {
    %c0_i32 = arith.constant 0 : i32
    %c0_i32_0 = arith.constant 0 : i32
    %c0_i32_1 = arith.constant 0 : i32
    return %c0_i32, %c0_i32_0 : i32, i32
  }
  func.func @transform_6(%arg0: i32) -> (i32, i32) {
    %c0_i32 = arith.constant 0 : i32
    %c0_i32_0 = arith.constant 0 : i32
    %c0_i32_1 = arith.constant 0 : i32
    return %c0_i32, %c0_i32_0 : i32, i32
  }
  func.func @transform_7(%arg0: i32) -> (i32, i32) {
    %c0_i32 = arith.constant 0 : i32
    %c0_i32_0 = arith.constant 0 : i32
    return %arg0, %c0_i32 : i32, i32
  }
}

</mosaic_0001>

<llo_original>
// kernel: tpu_custom_call.1
$region0: #{tpu_custom_call.1}
  #allocation0 [shape = 'u32[]', space=smem, size = 0x4, offset = 0x4, fixed_abs, tag = 'smem constant byte address 0x4 - core index']
  #allocation1 [shape = 'u32[144,128]{1,0:T(1,128)}', space=vmem, size = 0x12000, scoped, tag = 'internal scratch']
  %s0 = inlined_call_operand.hbm [shape: f32[16,128], index: 0, kind: input, shape index: {}]
  %s1 = inlined_call_operand.hbm [shape: f32[16,128], index: 1, kind: input, shape index: {}]
  %s2 = inlined_call_operand.hbm [shape: f32[128,128], index: 2, kind: input, shape index: {}]
  %s3 = inlined_call_operand.hbm [shape: f32[128,128], index: 3, kind: input, shape index: {}]
  %s4 = inlined_call_operand.vmem [shape: f32[1,128], index: 4, kind: input, shape index: {}]
  %s5 = inlined_call_operand.hbm [shape: f32[128,128], index: 5, kind: input, shape index: {}]
  %s6 = inlined_call_operand.vmem [shape: f32[1,128], index: 6, kind: input, shape index: {}]
  %s7 = inlined_call_operand.hbm [shape: f32[16,128], index: 7, kind: output, shape index: {}]
  %s8 = sld [smem:[#allocation0]]
  $region58: #{tpu_custom_call.1} parent=0
    _
  %s10 = ssub.s32 1, %s8
  %s11 = scalar_select 0, %s10, %s8
  $region1: #{tpu_custom_call.1} parent=0
    #allocation2 [shape = 'u8[8192]{0}', space=vmem, size = 0x2000, scoped, tag = 'input window, operand 0, single buffered']
    #allocation3 [shape = 's32[1]{0}', space=sflag, size = 0x4, scoped, tag = 'scoped memory for tpu_custom_call.1']
    #allocation4 [shape = 's32[1]{0}', space=sflag, size = 0x4, scoped, tag = 'scoped memory for tpu_custom_call.1']
    #allocation5 [shape = 'u8[8192]{0}', space=vmem, size = 0x2000, scoped, tag = 'input window, operand 1, single buffered']
    #allocation6 [shape = 's32[1]{0}', space=sflag, size = 0x4, scoped, tag = 'scoped memory for tpu_custom_call.1']
    #allocation7 [shape = 'u8[65536]{0}', space=vmem, size = 0x10000, scoped, tag = 'input window, operand 2, single buffered']
    #allocation8 [shape = 'u8[65536]{0}', space=vmem, size = 0x10000, scoped, tag = 'input window, operand 3, single buffered']
    #allocation9 [shape = 's32[1]{0}', space=sflag, size = 0x4, scoped, tag = 'scoped memory for tpu_custom_call.1']
    #allocation10 [shape = 'u8[65536]{0}', space=vmem, size = 0x10000, scoped, tag = 'input window, operand 5, single buffered']
    #allocation11 [shape = 'u8[8192]{0}', space=vmem, size = 0x2000, scoped, tag = 'output window, operand 0, single buffered']
    %12 = vsyncpa [#allocation3], 0
    %13 = vsyncpa [#allocation6], 0
    %14 = vsyncpa [#allocation9], 0
    %15 = vsyncpa [#allocation4], 0
    // Predicated region
    $region2: #{tpu_custom_call.1} parent=1 // pred_check
      _
    $region3: #{tpu_custom_call.1} parent=1 // pred_check_branch
      %17 = sbr.rel (0) target = $region5
    $region4: #{tpu_custom_call.1} parent=1 // pred_region
      %s19 = ssub.s32 256, 256
      %20 = vsyncadd [#allocation3], %s19
      %s21 = sshll.u32 [#allocation2], 4
      %s22 = int_to_ptr.vmem [resolvable:$true] %s21
      %27 = dma.hbm_to_vmem [thread:$0]  %s0, 256, %s22, [#allocation3], 128, 128, 8
    $region5: #{tpu_custom_call.1} parent=1 // pred_fallthru
      _
    // Predicated region
    $region6: #{tpu_custom_call.1} parent=1 // pred_check
      _
    $region7: #{tpu_custom_call.1} parent=1 // pred_check_branch
      %29 = sbr.rel (0) target = $region9
    $region8: #{tpu_custom_call.1} parent=1 // pred_region
      %s31 = ssub.s32 256, 256
      %32 = vsyncadd [#allocation6], %s31
      %s33 = sshll.u32 [#allocation5], 4
      %s34 = int_to_ptr.vmem [resolvable:$true] %s33
      %39 = dma.hbm_to_vmem [thread:$0]  %s1, 256, %s34, [#allocation6], 128, 128, 8
    $region9: #{tpu_custom_call.1} parent=1 // pred_fallthru
      _
    // Predicated region
    $region10: #{tpu_custom_call.1} parent=1 // pred_check
      _
    $region11: #{tpu_custom_call.1} parent=1 // pred_check_branch
      %41 = sbr.rel (0) target = $region13
    $region12: #{tpu_custom_call.1} parent=1 // pred_region
      %s43 = ssub.s32 2048, 2048
      %44 = vsyncadd [#allocation6], %s43
      %s45 = sshll.u32 [#allocation7], 4
      %s46 = int_to_ptr.vmem [resolvable:$true] %s45
      %51 = dma.hbm_to_vmem [thread:$0]  %s2, 2048, %s46, [#allocation6], 128, 128, 8
    $region13: #{tpu_custom_call.1} parent=1 // pred_fallthru
      _
    // Predicated region
    $region14: #{tpu_custom_call.1} parent=1 // pred_check
      _
    $region15: #{tpu_custom_call.1} parent=1 // pred_check_branch
      %53 = sbr.rel (0) target = $region17
    $region16: #{tpu_custom_call.1} parent=1 // pred_region
      %s55 = ssub.s32 2048, 2048
      %56 = vsyncadd [#allocation9], %s55
      %s57 = sshll.u32 [#allocation8], 4
      %s58 = int_to_ptr.vmem [resolvable:$true] %s57
      %63 = dma.hbm_to_vmem [thread:$0]  %s3, 2048, %s58, [#allocation9], 128, 128, 8
    $region17: #{tpu_custom_call.1} parent=1 // pred_fallthru
      _
    // Predicated region
    $region18: #{tpu_custom_call.1} parent=1 // pred_check
      _
    $region19: #{tpu_custom_call.1} parent=1 // pred_check_branch
      %65 = sbr.rel (0) target = $region21
    $region20: #{tpu_custom_call.1} parent=1 // pred_region
      _
    $region21: #{tpu_custom_call.1} parent=1 // pred_fallthru
      _
    // Predicated region
    $region22: #{tpu_custom_call.1} parent=1 // pred_check
      _
    $region23: #{tpu_custom_call.1} parent=1 // pred_check_branch
      %67 = sbr.rel (0) target = $region25
    $region24: #{tpu_custom_call.1} parent=1 // pred_region
      %s69 = ssub.s32 2048, 2048
      %70 = vsyncadd [#allocation9], %s69
      %s71 = sshll.u32 [#allocation10], 4
      %s72 = int_to_ptr.vmem [resolvable:$true] %s71
      %77 = dma.hbm_to_vmem [thread:$0]  %s5, 2048, %s72, [#allocation9], 128, 128, 8
    $region25: #{tpu_custom_call.1} parent=1 // pred_fallthru
      _
    // Predicated region
    $region26: #{tpu_custom_call.1} parent=1 // pred_check
      _
    $region27: #{tpu_custom_call.1} parent=1 // pred_check_branch
      %79 = sbr.rel (0) target = $region29
    $region28: #{tpu_custom_call.1} parent=1 // pred_region
      _
    $region29: #{tpu_custom_call.1} parent=1 // pred_fallthru
      _
    // Predicated region
    $region30: #{tpu_custom_call.1} parent=1 // pred_check
      _
    $region31: #{tpu_custom_call.1} parent=1 // pred_check_branch
      %81 = sbr.rel (0) target = $region33
    $region32: #{tpu_custom_call.1} parent=1 // pred_region
      %82 = dma.done [#allocation3], 256
    $region33: #{tpu_custom_call.1} parent=1 // pred_fallthru
      _
    // Predicated region
    $region34: #{tpu_custom_call.1} parent=1 // pred_check
      _
    $region35: #{tpu_custom_call.1} parent=1 // pred_check_branch
      %84 = sbr.rel (0) target = $region37
    $region36: #{tpu_custom_call.1} parent=1 // pred_region
      %85 = dma.done [#allocation6], 256
    $region37: #{tpu_custom_call.1} parent=1 // pred_fallthru
      _
    // Predicated region
    $region38: #{tpu_custom_call.1} parent=1 // pred_check
      _
    $region39: #{tpu_custom_call.1} parent=1 // pred_check_branch
      %87 = sbr.rel (0) target = $region41
    $region40: #{tpu_custom_call.1} parent=1 // pred_region
      %88 = dma.done [#allocation6], 2048
    $region41: #{tpu_custom_call.1} parent=1 // pred_fallthru
      _
    // Predicated region
    $region42: #{tpu_custom_call.1} parent=1 // pred_check
      _
    $region43: #{tpu_custom_call.1} parent=1 // pred_check_branch
      %90 = sbr.rel (0) target = $region45
    $region44: #{tpu_custom_call.1} parent=1 // pred_region
      %91 = dma.done [#allocation9], 2048
    $region45: #{tpu_custom_call.1} parent=1 // pred_fallthru
      _
    // Predicated region
    $region46: #{tpu_custom_call.1} parent=1 // pred_check
      _
    $region47: #{tpu_custom_call.1} parent=1 // pred_check_branch
      %93 = sbr.rel (0) target = $region49
    $region48: #{tpu_custom_call.1} parent=1 // pred_region
      %94 = dma.done [#allocation9], 2048
    $region49: #{tpu_custom_call.1} parent=1 // pred_fallthru
      _
    %v95 = vld [vmem:[#allocation2] sm:$0xff]
    %v96 = vld [vmem:[#allocation2 + $0x8] sm:$0xff]
    %v97 = vld [vmem:[#allocation7] sm:$0xff]
    %v98 = vld [vmem:[#allocation7 + $0x8] sm:$0xff]
    %v99 = vld [vmem:[#allocation7 + $0x10] sm:$0xff]
    %v100 = vld [vmem:[#allocation7 + $0x18] sm:$0xff]
    %v101 = vld [vmem:[#allocation7 + $0x20] sm:$0xff]
    %v102 = vld [vmem:[#allocation7 + $0x28] sm:$0xff]
    %v103 = vld [vmem:[#allocation7 + $0x30] sm:$0xff]
    %v104 = vld [vmem:[#allocation7 + $0x38] sm:$0xff]
    %v105 = vld [vmem:[#allocation7 + $0x40] sm:$0xff]
    %v106 = vld [vmem:[#allocation7 + $0x48] sm:$0xff]
    %v107 = vld [vmem:[#allocation7 + $0x50] sm:$0xff]
    %v108 = vld [vmem:[#allocation7 + $0x58] sm:$0xff]
    %v109 = vld [vmem:[#allocation7 + $0x60] sm:$0xff]
    %v110 = vld [vmem:[#allocation7 + $0x68] sm:$0xff]
    %v111 = vld [vmem:[#allocation7 + $0x70] sm:$0xff]
    %v112 = vld [vmem:[#allocation7 + $0x78] sm:$0xff]
    %v113 = vld [vmem:[#allocation5] sm:$0xff]
    %v114 = vld [vmem:[#allocation5 + $0x8] sm:$0xff]
    %v115 = vld [vmem:[#allocation8] sm:$0xff]
    %v116 = vld [vmem:[#allocation8 + $0x8] sm:$0xff]
    %v117 = vld [vmem:[#allocation8 + $0x10] sm:$0xff]
    %v118 = vld [vmem:[#allocation8 + $0x18] sm:$0xff]
    %v119 = vld [vmem:[#allocation8 + $0x20] sm:$0xff]
    %v120 = vld [vmem:[#allocation8 + $0x28] sm:$0xff]
    %v121 = vld [vmem:[#allocation8 + $0x30] sm:$0xff]
    %v122 = vld [vmem:[#allocation8 + $0x38] sm:$0xff]
    %v123 = vld [vmem:[#allocation8 + $0x40] sm:$0xff]
    %v124 = vld [vmem:[#allocation8 + $0x48] sm:$0xff]
    %v125 = vld [vmem:[#allocation8 + $0x50] sm:$0xff]
    %v126 = vld [vmem:[#allocation8 + $0x58] sm:$0xff]
    %v127 = vld [vmem:[#allocation8 + $0x60] sm:$0xff]
    %v128 = vld [vmem:[#allocation8 + $0x68] sm:$0xff]
    %v129 = vld [vmem:[#allocation8 + $0x70] sm:$0xff]
    %v130 = vld [vmem:[#allocation8 + $0x78] sm:$0xff]
    %131 = vmatprep.subr.mxu0 0.0
    %132 = vmatpush1.msra.mxu0 %v115
    %133 = vmatprep.subr.mxu0 0.0
    %134 = vmatpush1.msra.mxu0 %v116
    %135 = vmatprep.subr.mxu0 0.0
    %136 = vmatpush1.msra.mxu0 %v117
    %137 = vmatprep.subr.mxu0 0.0
    %138 = vmatpush1.msra.mxu0 %v118
    %139 = vmatprep.subr.mxu0 0.0
    %140 = vmatpush1.msra.mxu0 %v119
    %141 = vmatprep.subr.mxu0 0.0
    %142 = vmatpush1.msra.mxu0 %v120
    %143 = vmatprep.subr.mxu0 0.0
    %144 = vmatpush1.msra.mxu0 %v121
    %145 = vmatprep.subr.mxu0 0.0
    %146 = vmatpush1.msra.mxu0 %v122
    %147 = vmatprep.subr.mxu0 0.0
    %148 = vmatpush1.msra.mxu0 %v123
    %149 = vmatprep.subr.mxu0 0.0
    %150 = vmatpush1.msra.mxu0 %v124
    %151 = vmatprep.subr.mxu0 0.0
    %152 = vmatpush1.msra.mxu0 %v125
    %153 = vmatprep.subr.mxu0 0.0
    %154 = vmatpush1.msra.mxu0 %v126
    %155 = vmatprep.subr.mxu0 0.0
    %156 = vmatpush1.msra.mxu0 %v127
    %157 = vmatprep.subr.mxu0 0.0
    %158 = vmatpush1.msra.mxu0 %v128
    %159 = vmatprep.subr.mxu0 0.0
    %160 = vmatpush1.msra.mxu0 %v129
    %161 = vmatprep.subr.mxu0 0.0
    %162 = vmatpush1.msra.mxu0 %v130
    %163 = vmatprep.subr.mxu0 0.0
    %164 = vmatpush1.msra.mxu0 0.0
    %165 = vmatprep.subr.mxu0 0.0
    %166 = vmatpush1.msra.mxu0 0.0
    %167 = vmatprep.subr.mxu0 0.0
    %168 = vmatpush1.msra.mxu0 0.0
    %169 = vmatprep.subr.mxu0 0.0
    %170 = vmatpush1.msra.mxu0 0.0
    %171 = vmatprep.subr.mxu0 0.0
    %172 = vmatpush1.msra.mxu0 0.0
    %173 = vmatprep.subr.mxu0 0.0
    %174 = vmatpush1.msra.mxu0 0.0
    %175 = vmatprep.subr.mxu0 0.0
    %176 = vmatpush1.msra.mxu0 0.0
    %177 = vmatprep.subr.mxu0 0.0
    %178 = vmatpush1.msra.mxu0 0.0
    %179 = vmatprep.subr.mxu0 0.0
    %180 = vmatpush1.msra.mxu0 0.0
    %181 = vmatprep.subr.mxu0 0.0
    %182 = vmatpush1.msra.mxu0 0.0
    %183 = vmatprep.subr.mxu0 0.0
    %184 = vmatpush1.msra.mxu0 0.0
    %185 = vmatprep.subr.mxu0 0.0
    %186 = vmatpush1.msra.mxu0 0.0
    %187 = vmatprep.subr.mxu0 0.0
    %188 = vmatpush1.msra.mxu0 0.0
    %189 = vmatprep.subr.mxu0 0.0
    %190 = vmatpush1.msra.mxu0 0.0
    %191 = vmatprep.subr.mxu0 0.0
    %192 = vmatpush1.msra.mxu0 0.0
    %193 = vmatprep.subr.mxu0 0.0
    %194 = vmatpush1.msra.mxu0 0.0
    %195 = vmatprep.mubr.f32.mxu0 0.0
    %196 = vmatmul.mubr.f32.gmra.mrb[0].mxu0 %v113
    %v197 = vpop.f32.mrb[0].mxu0
    %v198 = vadd.f32 0.0, %v197
    %v199 = vpop.f32.mrb[0].mxu0
    %200 = vmatprep.mubr.f32.mxu0 0.0
    %201 = vmatmul.mubr.f32.gmra.mrb[0].mxu0 %v114
    %v202 = vpop.f32.mrb[0].mxu0
    %v203 = vadd.f32 0.0, %v202
    %v204 = vpop.f32.mrb[0].mxu0
    %205 = vdwg.mxu0
    %206 = vmatprep.subr.mxu0 0.0
    %207 = vmatpush1.msra.mxu0 %v97
    %208 = vmatprep.subr.mxu0 0.0
    %209 = vmatpush1.msra.mxu0 %v98
    %210 = vmatprep.subr.mxu0 0.0
    %211 = vmatpush1.msra.mxu0 %v99
    %212 = vmatprep.subr.mxu0 0.0
    %213 = vmatpush1.msra.mxu0 %v100
    %214 = vmatprep.subr.mxu0 0.0
    %215 = vmatpush1.msra.mxu0 %v101
    %216 = vmatprep.subr.mxu0 0.0
    %217 = vmatpush1.msra.mxu0 %v102
    %218 = vmatprep.subr.mxu0 0.0
    %219 = vmatpush1.msra.mxu0 %v103
    %220 = vmatprep.subr.mxu0 0.0
    %221 = vmatpush1.msra.mxu0 %v104
    %222 = vmatprep.subr.mxu0 0.0
    %223 = vmatpush1.msra.mxu0 %v105
    %224 = vmatprep.subr.mxu0 0.0
    %225 = vmatpush1.msra.mxu0 %v106
    %226 = vmatprep.subr.mxu0 0.0
    %227 = vmatpush1.msra.mxu0 %v107
    %228 = vmatprep.subr.mxu0 0.0
    %229 = vmatpush1.msra.mxu0 %v108
    %230 = vmatprep.subr.mxu0 0.0
    %231 = vmatpush1.msra.mxu0 %v109
    %232 = vmatprep.subr.mxu0 0.0
    %233 = vmatpush1.msra.mxu0 %v110
    %234 = vmatprep.subr.mxu0 0.0
    %235 = vmatpush1.msra.mxu0 %v111
    %236 = vmatprep.subr.mxu0 0.0
    %237 = vmatpush1.msra.mxu0 %v112
    %238 = vmatprep.subr.mxu0 0.0
    %239 = vmatpush1.msra.mxu0 0.0
    %240 = vmatprep.subr.mxu0 0.0
    %241 = vmatpush1.msra.mxu0 0.0
    %242 = vmatprep.subr.mxu0 0.0
    %243 = vmatpush1.msra.mxu0 0.0
    %244 = vmatprep.subr.mxu0 0.0
    %245 = vmatpush1.msra.mxu0 0.0
    %246 = vmatprep.subr.mxu0 0.0
    %247 = vmatpush1.msra.mxu0 0.0
    %248 = vmatprep.subr.mxu0 0.0
    %249 = vmatpush1.msra.mxu0 0.0
    %250 = vmatprep.subr.mxu0 0.0
    %251 = vmatpush1.msra.mxu0 0.0
    %252 = vmatprep.subr.mxu0 0.0
    %253 = vmatpush1.msra.mxu0 0.0
    %254 = vmatprep.subr.mxu0 0.0
    %255 = vmatpush1.msra.mxu0 0.0
    %256 = vmatprep.subr.mxu0 0.0
    %257 = vmatpush1.msra.mxu0 0.0
    %258 = vmatprep.subr.mxu0 0.0
    %259 = vmatpush1.msra.mxu0 0.0
    %260 = vmatprep.subr.mxu0 0.0
    %261 = vmatpush1.msra.mxu0 0.0
    %262 = vmatprep.subr.mxu0 0.0
    %263 = vmatpush1.msra.mxu0 0.0
    %264 = vmatprep.subr.mxu0 0.0
    %265 = vmatpush1.msra.mxu0 0.0
    %266 = vmatprep.subr.mxu0 0.0
    %267 = vmatpush1.msra.mxu0 0.0
    %268 = vmatprep.subr.mxu0 0.0
    %269 = vmatpush1.msra.mxu0 0.0
    %270 = vmatprep.mubr.f32.mxu0 0.0
    %271 = vmatmul.mubr.f32.gmra.mrb[0].mxu0 %v95
    %v272 = vpop.f32.mrb[0].mxu0
    %v273 = vadd.f32 %v198, %v272
    %v274 = vpop.f32.mrb[0].mxu0
    %275 = vmatprep.mubr.f32.mxu0 0.0
    %276 = vmatmul.mubr.f32.gmra.mrb[0].mxu0 %v96
    %v277 = vpop.f32.mrb[0].mxu0
    %v278 = vadd.f32 %v203, %v277
    %v279 = vpop.f32.mrb[0].mxu0
    %280 = vdwg.mxu0
    %v281 = vld [vmem:[%s4] sm:$0x1]
    %v283 = vlaneseq
    %v284 = vshrl.u32 %v283, 7
    %v285 = vsub.s32 0, %v284
    %v286 = vrot.slane %v281, %v285
    %v288 = vadd.f32 %v273, %v286
    %v289 = vadd.f32 %v278, %v286
    %v290 = vmax.f32 %v288, 0.0
    %v291 = vmax.f32 %v289, 0.0
    %v292 = vld [vmem:[#allocation10] sm:$0xff]
    %v293 = vld [vmem:[#allocation10 + $0x8] sm:$0xff]
    %v294 = vld [vmem:[#allocation10 + $0x10] sm:$0xff]
    %v295 = vld [vmem:[#allocation10 + $0x18] sm:$0xff]
    %v296 = vld [vmem:[#allocation10 + $0x20] sm:$0xff]
    %v297 = vld [vmem:[#allocation10 + $0x28] sm:$0xff]
    %v298 = vld [vmem:[#allocation10 + $0x30] sm:$0xff]
    %v299 = vld [vmem:[#allocation10 + $0x38] sm:$0xff]
    %v300 = vld [vmem:[#allocation10 + $0x40] sm:$0xff]
    %v301 = vld [vmem:[#allocation10 + $0x48] sm:$0xff]
    %v302 = vld [vmem:[#allocation10 + $0x50] sm:$0xff]
    %v303 = vld [vmem:[#allocation10 + $0x58] sm:$0xff]
    %v304 = vld [vmem:[#allocation10 + $0x60] sm:$0xff]
    %v305 = vld [vmem:[#allocation10 + $0x68] sm:$0xff]
    %v306 = vld [vmem:[#allocation10 + $0x70] sm:$0xff]
    %v307 = vld [vmem:[#allocation10 + $0x78] sm:$0xff]
    %v308 = vld [vmem:[%s6] sm:$0x1]
    %v310 = vlaneseq
    %v311 = vshrl.u32 %v310, 7
    %v312 = vsub.s32 0, %v311
    %v313 = vrot.slane %v308, %v312
    %315 = vmatprep.subr.mxu0 0.0
    %316 = vmatpush1.msra.mxu0 %v292
    %317 = vmatprep.subr.mxu0 0.0
    %318 = vmatpush1.msra.mxu0 %v293
    %319 = vmatprep.subr.mxu0 0.0
    %320 = vmatpush1.msra.mxu0 %v294
    %321 = vmatprep.subr.mxu0 0.0
    %322 = vmatpush1.msra.mxu0 %v295
    %323 = vmatprep.subr.mxu0 0.0
    %324 = vmatpush1.msra.mxu0 %v296
    %325 = vmatprep.subr.mxu0 0.0
    %326 = vmatpush1.msra.mxu0 %v297
    %327 = vmatprep.subr.mxu0 0.0
    %328 = vmatpush1.msra.mxu0 %v298
    %329 = vmatprep.subr.mxu0 0.0
    %330 = vmatpush1.msra.mxu0 %v299
    %331 = vmatprep.subr.mxu0 0.0
    %332 = vmatpush1.msra.mxu0 %v300
    %333 = vmatprep.subr.mxu0 0.0
    %334 = vmatpush1.msra.mxu0 %v301
    %335 = vmatprep.subr.mxu0 0.0
    %336 = vmatpush1.msra.mxu0 %v302
    %337 = vmatprep.subr.mxu0 0.0
    %338 = vmatpush1.msra.mxu0 %v303
    %339 = vmatprep.subr.mxu0 0.0
    %340 = vmatpush1.msra.mxu0 %v304
    %341 = vmatprep.subr.mxu0 0.0
    %342 = vmatpush1.msra.mxu0 %v305
    %343 = vmatprep.subr.mxu0 0.0
    %344 = vmatpush1.msra.mxu0 %v306
    %345 = vmatprep.subr.mxu0 0.0
    %346 = vmatpush1.msra.mxu0 %v307
    %347 = vmatprep.subr.mxu0 0.0
    %348 = vmatpush1.msra.mxu0 0.0
    %349 = vmatprep.subr.mxu0 0.0
    %350 = vmatpush1.msra.mxu0 0.0
    %351 = vmatprep.subr.mxu0 0.0
    %352 = vmatpush1.msra.mxu0 0.0
    %353 = vmatprep.subr.mxu0 0.0
    %354 = vmatpush1.msra.mxu0 0.0
    %355 = vmatprep.subr.mxu0 0.0
    %356 = vmatpush1.msra.mxu0 0.0
    %357 = vmatprep.subr.mxu0 0.0
    %358 = vmatpush1.msra.mxu0 0.0
    %359 = vmatprep.subr.mxu0 0.0
    %360 = vmatpush1.msra.mxu0 0.0
    %361 = vmatprep.subr.mxu0 0.0
    %362 = vmatpush1.msra.mxu0 0.0
    %363 = vmatprep.subr.mxu0 0.0
    %364 = vmatpush1.msra.mxu0 0.0
    %365 = vmatprep.subr.mxu0 0.0
    %366 = vmatpush1.msra.mxu0 0.0
    %367 = vmatprep.subr.mxu0 0.0
    %368 = vmatpush1.msra.mxu0 0.0
    %369 = vmatprep.subr.mxu0 0.0
    %370 = vmatpush1.msra.mxu0 0.0
    %371 = vmatprep.subr.mxu0 0.0
    %372 = vmatpush1.msra.mxu0 0.0
    %373 = vmatprep.subr.mxu0 0.0
    %374 = vmatpush1.msra.mxu0 0.0
    %375 = vmatprep.subr.mxu0 0.0
    %376 = vmatpush1.msra.mxu0 0.0
    %377 = vmatprep.subr.mxu0 0.0
    %378 = vmatpush1.msra.mxu0 0.0
    %379 = vmatprep.mubr.f32.mxu0 0.0
    %380 = vmatmul.mubr.f32.gmra.mrb[0].mxu0 %v290
    %v381 = vpop.f32.mrb[0].mxu0
    %v382 = vadd.f32 %v313, %v381
    %v383 = vpop.f32.mrb[0].mxu0
    %384 = vmatprep.mubr.f32.mxu0 0.0
    %385 = vmatmul.mubr.f32.gmra.mrb[0].mxu0 %v291
    %v386 = vpop.f32.mrb[0].mxu0
    %v387 = vadd.f32 %v313, %v386
    %v388 = vpop.f32.mrb[0].mxu0
    %389 = vdwg.mxu0
    %390 = vst [vmem:[#allocation11] sm:$0xff] %v382
    %391 = vst [vmem:[#allocation11 + $0x8] sm:$0xff] %v387
    // Predicated region
    $region50: #{tpu_custom_call.1} parent=1 // pred_check
      _
    $region51: #{tpu_custom_call.1} parent=1 // pred_check_branch
      %393 = sbr.rel (0) target = $region53
    $region52: #{tpu_custom_call.1} parent=1 // pred_region
      %s395 = ssub.s32 256, 256
      %396 = vsyncadd [#allocation4], %s395
      %s397 = sshll.u32 [#allocation11], 4
      %s398 = int_to_ptr.vmem [resolvable:$true] %s397
      %403 = dma.vmem_to_hbm [thread:$0]  %s398, 256, %s7, [#allocation4], 128, 128, 8
    $region53: #{tpu_custom_call.1} parent=1 // pred_fallthru
      _
    // Predicated region
    $region54: #{tpu_custom_call.1} parent=1 // pred_check
      _
    $region55: #{tpu_custom_call.1} parent=1 // pred_check_branch
      %405 = sbr.rel (0) target = $region57
    $region56: #{tpu_custom_call.1} parent=1 // pred_region
      %406 = dma.done [#allocation4], 256
    $region57: #{tpu_custom_call.1} parent=1 // pred_fallthru
      _
    %407 = vsyncpa [#allocation3], 1
    %408 = vsyncpa [#allocation6], 1
    %409 = vsyncpa [#allocation9], 1
    %410 = vsyncpa [#allocation4], 1

// kernel: tpu_custom_call.1
$region0: #{tpu_custom_call.1}
  #allocation0 [shape = 'u32[]', space=smem, size = 0x4, offset = 0x4, fixed_abs, tag = 'smem constant byte address 0x4 - core index']
  #allocation1 [shape = 'u32[144,128]{1,0:T(1,128)}', space=vmem, size = 0x12000, scoped, tag = 'internal scratch']
  %s0 = inlined_call_operand.hbm [shape: f32[16,128], index: 0, kind: input, shape index: {}]
  %s1 = inlined_call_operand.hbm [shape: f32[16,128], index: 1, kind: input, shape index: {}]
  %s2 = inlined_call_operand.hbm [shape: f32[128,128], index: 2, kind: input, shape index: {}]
  %s3 = inlined_call_operand.hbm [shape: f32[128,128], index: 3, kind: input, shape index: {}]
  %s4 = inlined_call_operand.vmem [shape: f32[1,128], index: 4, kind: input, shape index: {}]
  %s5 = inlined_call_operand.hbm [shape: f32[128,128], index: 5, kind: input, shape index: {}]
  %s6 = inlined_call_operand.vmem [shape: f32[1,128], index: 6, kind: input, shape index: {}]
  %s7 = inlined_call_operand.hbm [shape: f32[16,128], index: 7, kind: output, shape index: {}]
  %s8 = sld [smem:[#allocation0]]
  $region58: #{tpu_custom_call.1} parent=0
    _
  %s10 = ssub.s32 1, %s8
  %s11 = scalar_select 0, %s10, %s8
  $region1: #{tpu_custom_call.1} parent=0
    #allocation2 [shape = 'u8[8192]{0}', space=vmem, size = 0x2000, scoped, tag = 'input window, operand 0, single buffered']
    #allocation3 [shape = 's32[1]{0}', space=sflag, size = 0x4, scoped, tag = 'scoped memory for tpu_custom_call.1']
    #allocation4 [shape = 's32[1]{0}', space=sflag, size = 0x4, scoped, tag = 'scoped memory for tpu_custom_call.1']
    #allocation5 [shape = 'u8[8192]{0}', space=vmem, size = 0x2000, scoped, tag = 'input window, operand 1, single buffered']
    #allocation6 [shape = 's32[1]{0}', space=sflag, size = 0x4, scoped, tag = 'scoped memory for tpu_custom_call.1']
    #allocation7 [shape = 'u8[65536]{0}', space=vmem, size = 0x10000, scoped, tag = 'input window, operand 2, single buffered']
    #allocation8 [shape = 'u8[65536]{0}', space=vmem, size = 0x10000, scoped, tag = 'input window, operand 3, single buffered']
    #allocation9 [shape = 's32[1]{0}', space=sflag, size = 0x4, scoped, tag = 'scoped memory for tpu_custom_call.1']
    #allocation10 [shape = 'u8[65536]{0}', space=vmem, size = 0x10000, scoped, tag = 'input window, operand 5, single buffered']
    #allocation11 [shape = 'u8[8192]{0}', space=vmem, size = 0x2000, scoped, tag = 'output window, operand 0, single buffered']
    %12 = vsyncpa [#allocation3], 0
    %13 = vsyncpa [#allocation6], 0
    %14 = vsyncpa [#allocation9], 0
    %15 = vsyncpa [#allocation4], 0
    // Predicated region
    $region2: #{tpu_custom_call.1} parent=1 // pred_check
      _
    $region3: #{tpu_custom_call.1} parent=1 // pred_check_branch
      %17 = sbr.rel (0) target = $region5
    $region4: #{tpu_custom_call.1} parent=1 // pred_region
      %s19 = ssub.s32 256, 256
      %20 = vsyncadd [#allocation3], %s19
      %s21 = sshll.u32 [#allocation2], 4
      %s22 = int_to_ptr.vmem [resolvable:$true] %s21
      %27 = dma.hbm_to_vmem [thread:$0]  %s0, 256, %s22, [#allocation3], 128, 128, 8
    $region5: #{tpu_custom_call.1} parent=1 // pred_fallthru
      _
    // Predicated region
    $region6: #{tpu_custom_call.1} parent=1 // pred_check
      _
    $region7: #{tpu_custom_call.1} parent=1 // pred_check_branch
      %29 = sbr.rel (0) target = $region9
    $region8: #{tpu_custom_call.1} parent=1 // pred_region
      %s31 = ssub.s32 256, 256
      %32 = vsyncadd [#allocation6], %s31
      %s33 = sshll.u32 [#allocation5], 4
      %s34 = int_to_ptr.vmem [resolvable:$true] %s33
      %39 = dma.hbm_to_vmem [thread:$0]  %s1, 256, %s34, [#allocation6], 128, 128, 8
    $region9: #{tpu_custom_call.1} parent=1 // pred_fallthru
      _
    // Predicated region
    $region10: #{tpu_custom_call.1} parent=1 // pred_check
      _
    $region11: #{tpu_custom_call.1} parent=1 // pred_check_branch
      %41 = sbr.rel (0) target = $region13
    $region12: #{tpu_custom_call.1} parent=1 // pred_region
      %s43 = ssub.s32 2048, 2048
      %44 = vsyncadd [#allocation6], %s43
      %s45 = sshll.u32 [#allocation7], 4
      %s46 = int_to_ptr.vmem [resolvable:$true] %s45
      %51 = dma.hbm_to_vmem [thread:$0]  %s2, 2048, %s46, [#allocation6], 128, 128, 8
    $region13: #{tpu_custom_call.1} parent=1 // pred_fallthru
      _
    // Predicated region
    $region14: #{tpu_custom_call.1} parent=1 // pred_check
      _
    $region15: #{tpu_custom_call.1} parent=1 // pred_check_branch
      %53 = sbr.rel (0) target = $region17
    $region16: #{tpu_custom_call.1} parent=1 // pred_region
      %s55 = ssub.s32 2048, 2048
      %56 = vsyncadd [#allocation9], %s55
      %s57 = sshll.u32 [#allocation8], 4
      %s58 = int_to_ptr.vmem [resolvable:$true] %s57
      %63 = dma.hbm_to_vmem [thread:$0]  %s3, 2048, %s58, [#allocation9], 128, 128, 8
    $region17: #{tpu_custom_call.1} parent=1 // pred_fallthru
      _
    // Predicated region
    $region18: #{tpu_custom_call.1} parent=1 // pred_check
      _
    $region19: #{tpu_custom_call.1} parent=1 // pred_check_branch
      %65 = sbr.rel (0) target = $region21
    $region20: #{tpu_custom_call.1} parent=1 // pred_region
      _
    $region21: #{tpu_custom_call.1} parent=1 // pred_fallthru
      _
    // Predicated region
    $region22: #{tpu_custom_call.1} parent=1 // pred_check
      _
    $region23: #{tpu_custom_call.1} parent=1 // pred_check_branch
      %67 = sbr.rel (0) target = $region25
    $region24: #{tpu_custom_call.1} parent=1 // pred_region
      %s69 = ssub.s32 2048, 2048
      %70 = vsyncadd [#allocation9], %s69
      %s71 = sshll.u32 [#allocation10], 4
      %s72 = int_to_ptr.vmem [resolvable:$true] %s71
      %77 = dma.hbm_to_vmem [thread:$0]  %s5, 2048, %s72, [#allocation9], 128, 128, 8
    $region25: #{tpu_custom_call.1} parent=1 // pred_fallthru
      _
    // Predicated region
    $region26: #{tpu_custom_call.1} parent=1 // pred_check
      _
    $region27: #{tpu_custom_call.1} parent=1 // pred_check_branch
      %79 = sbr.rel (0) target = $region29
    $region28: #{tpu_custom_call.1} parent=1 // pred_region
      _
    $region29: #{tpu_custom_call.1} parent=1 // pred_fallthru
      _
    // Predicated region
    $region30: #{tpu_custom_call.1} parent=1 // pred_check
      _
    $region31: #{tpu_custom_call.1} parent=1 // pred_check_branch
      %81 = sbr.rel (0) target = $region33
    $region32: #{tpu_custom_call.1} parent=1 // pred_region
      %82 = dma.done [#allocation3], 256
    $region33: #{tpu_custom_call.1} parent=1 // pred_fallthru
      _
    // Predicated region
    $region34: #{tpu_custom_call.1} parent=1 // pred_check
      _
    $region35: #{tpu_custom_call.1} parent=1 // pred_check_branch
      %84 = sbr.rel (0) target = $region37
    $region36: #{tpu_custom_call.1} parent=1 // pred_region
      %85 = dma.done [#allocation6], 256
    $region37: #{tpu_custom_call.1} parent=1 // pred_fallthru
      _
    // Predicated region
    $region38: #{tpu_custom_call.1} parent=1 // pred_check
      _
    $region39: #{tpu_custom_call.1} parent=1 // pred_check_branch
      %87 = sbr.rel (0) target = $region41
    $region40: #{tpu_custom_call.1} parent=1 // pred_region
      %88 = dma.done [#allocation6], 2048
    $region41: #{tpu_custom_call.1} parent=1 // pred_fallthru
      _
    // Predicated region
    $region42: #{tpu_custom_call.1} parent=1 // pred_check
      _
    $region43: #{tpu_custom_call.1} parent=1 // pred_check_branch
      %90 = sbr.rel (0) target = $region45
    $region44: #{tpu_custom_call.1} parent=1 // pred_region
      %91 = dma.done [#allocation9], 2048
    $region45: #{tpu_custom_call.1} parent=1 // pred_fallthru
      _
    // Predicated region
    $region46: #{tpu_custom_call.1} parent=1 // pred_check
      _
    $region47: #{tpu_custom_call.1} parent=1 // pred_check_branch
      %93 = sbr.rel (0) target = $region49
    $region48: #{tpu_custom_call.1} parent=1 // pred_region
      %94 = dma.done [#allocation9], 2048
    $region49: #{tpu_custom_call.1} parent=1 // pred_fallthru
      _
    %v95 = vld [vmem:[#allocation2] sm:$0xff]
    %v96 = vld [vmem:[#allocation2 + $0x8] sm:$0xff]
    %v97 = vld [vmem:[#allocation7] sm:$0xff]
    %v98 = vld [vmem:[#allocation7 + $0x8] sm:$0xff]
    %v99 = vld [vmem:[#allocation7 + $0x10] sm:$0xff]
    %v100 = vld [vmem:[#allocation7 + $0x18] sm:$0xff]
    %v101 = vld [vmem:[#allocation7 + $0x20] sm:$0xff]
    %v102 = vld [vmem:[#allocation7 + $0x28] sm:$0xff]
    %v103 = vld [vmem:[#allocation7 + $0x30] sm:$0xff]
    %v104 = vld [vmem:[#allocation7 + $0x38] sm:$0xff]
    %v105 = vld [vmem:[#allocation7 + $0x40] sm:$0xff]
    %v106 = vld [vmem:[#allocation7 + $0x48] sm:$0xff]
    %v107 = vld [vmem:[#allocation7 + $0x50] sm:$0xff]
    %v108 = vld [vmem:[#allocation7 + $0x58] sm:$0xff]
    %v109 = vld [vmem:[#allocation7 + $0x60] sm:$0xff]
    %v110 = vld [vmem:[#allocation7 + $0x68] sm:$0xff]
    %v111 = vld [vmem:[#allocation7 + $0x70] sm:$0xff]
    %v112 = vld [vmem:[#allocation7 + $0x78] sm:$0xff]
    %v113 = vld [vmem:[#allocation5] sm:$0xff]
    %v114 = vld [vmem:[#allocation5 + $0x8] sm:$0xff]
    %v115 = vld [vmem:[#allocation8] sm:$0xff]
    %v116 = vld [vmem:[#allocation8 + $0x8] sm:$0xff]
    %v117 = vld [vmem:[#allocation8 + $0x10] sm:$0xff]
    %v118 = vld [vmem:[#allocation8 + $0x18] sm:$0xff]
    %v119 = vld [vmem:[#allocation8 + $0x20] sm:$0xff]
    %v120 = vld [vmem:[#allocation8 + $0x28] sm:$0xff]
    %v121 = vld [vmem:[#allocation8 + $0x30] sm:$0xff]
    %v122 = vld [vmem:[#allocation8 + $0x38] sm:$0xff]
    %v123 = vld [vmem:[#allocation8 + $0x40] sm:$0xff]
    %v124 = vld [vmem:[#allocation8 + $0x48] sm:$0xff]
    %v125 = vld [vmem:[#allocation8 + $0x50] sm:$0xff]
    %v126 = vld [vmem:[#allocation8 + $0x58] sm:$0xff]
    %v127 = vld [vmem:[#allocation8 + $0x60] sm:$0xff]
    %v128 = vld [vmem:[#allocation8 + $0x68] sm:$0xff]
    %v129 = vld [vmem:[#allocation8 + $0x70] sm:$0xff]
    %v130 = vld [vmem:[#allocation8 + $0x78] sm:$0xff]
    %131 = vmatprep.subr.mxu0 0.0
    %132 = vmatpush1.msra.mxu0 %v115
    %133 = vmatprep.subr.mxu0 0.0
    %134 = vmatpush1.msra.mxu0 %v116
    %135 = vmatprep.subr.mxu0 0.0
    %136 = vmatpush1.msra.mxu0 %v117
    %137 = vmatprep.subr.mxu0 0.0
    %138 = vmatpush1.msra.mxu0 %v118
    %139 = vmatprep.subr.mxu0 0.0
    %140 = vmatpush1.msra.mxu0 %v119
    %141 = vmatprep.subr.mxu0 0.0
    %142 = vmatpush1.msra.mxu0 %v120
    %143 = vmatprep.subr.mxu0 0.0
    %144 = vmatpush1.msra.mxu0 %v121
    %145 = vmatprep.subr.mxu0 0.0
    %146 = vmatpush1.msra.mxu0 %v122
    %147 = vmatprep.subr.mxu0 0.0
    %148 = vmatpush1.msra.mxu0 %v123
    %149 = vmatprep.subr.mxu0 0.0
    %150 = vmatpush1.msra.mxu0 %v124
    %151 = vmatprep.subr.mxu0 0.0
    %152 = vmatpush1.msra.mxu0 %v125
    %153 = vmatprep.subr.mxu0 0.0
    %154 = vmatpush1.msra.mxu0 %v126
    %155 = vmatprep.subr.mxu0 0.0
    %156 = vmatpush1.msra.mxu0 %v127
    %157 = vmatprep.subr.mxu0 0.0
    %158 = vmatpush1.msra.mxu0 %v128
    %159 = vmatprep.subr.mxu0 0.0
    %160 = vmatpush1.msra.mxu0 %v129
    %161 = vmatprep.subr.mxu0 0.0
    %162 = vmatpush1.msra.mxu0 %v130
    %163 = vmatprep.subr.mxu0 0.0
    %164 = vmatpush1.msra.mxu0 0.0
    %165 = vmatprep.subr.mxu0 0.0
    %166 = vmatpush1.msra.mxu0 0.0
    %167 = vmatprep.subr.mxu0 0.0
    %168 = vmatpush1.msra.mxu0 0.0
    %169 = vmatprep.subr.mxu0 0.0
    %170 = vmatpush1.msra.mxu0 0.0
    %171 = vmatprep.subr.mxu0 0.0
    %172 = vmatpush1.msra.mxu0 0.0
    %173 = vmatprep.subr.mxu0 0.0
    %174 = vmatpush1.msra.mxu0 0.0
    %175 = vmatprep.subr.mxu0 0.0
    %176 = vmatpush1.msra.mxu0 0.0
    %177 = vmatprep.subr.mxu0 0.0
    %178 = vmatpush1.msra.mxu0 0.0
    %179 = vmatprep.subr.mxu0 0.0
    %180 = vmatpush1.msra.mxu0 0.0
    %181 = vmatprep.subr.mxu0 0.0
    %182 = vmatpush1.msra.mxu0 0.0
    %183 = vmatprep.subr.mxu0 0.0
    %184 = vmatpush1.msra.mxu0 0.0
    %185 = vmatprep.subr.mxu0 0.0
    %186 = vmatpush1.msra.mxu0 0.0
    %187 = vmatprep.subr.mxu0 0.0
    %188 = vmatpush1.msra.mxu0 0.0
    %189 = vmatprep.subr.mxu0 0.0
    %190 = vmatpush1.msra.mxu0 0.0
    %191 = vmatprep.subr.mxu0 0.0
    %192 = vmatpush1.msra.mxu0 0.0
    %193 = vmatprep.subr.mxu0 0.0
    %194 = vmatpush1.msra.mxu0 0.0
    %195 = vmatprep.mubr.f32.mxu0 0.0
    %196 = vmatmul.mubr.f32.gmra.mrb[0].mxu0 %v113
    %v197 = vpop.f32.mrb[0].mxu0
    %v198 = vadd.f32 0.0, %v197
    %v199 = vpop.f32.mrb[0].mxu0
    %200 = vmatprep.mubr.f32.mxu0 0.0
    %201 = vmatmul.mubr.f32.gmra.mrb[0].mxu0 %v114
    %v202 = vpop.f32.mrb[0].mxu0
    %v203 = vadd.f32 0.0, %v202
    %v204 = vpop.f32.mrb[0].mxu0
    %205 = vdwg.mxu0
    %206 = vmatprep.subr.mxu0 0.0
    %207 = vmatpush1.msra.mxu0 %v97
    %208 = vmatprep.subr.mxu0 0.0
    %209 = vmatpush1.msra.mxu0 %v98
    %210 = vmatprep.subr.mxu0 0.0
    %211 = vmatpush1.msra.mxu0 %v99
    %212 = vmatprep.subr.mxu0 0.0
    %213 = vmatpush1.msra.mxu0 %v100
    %214 = vmatprep.subr.mxu0 0.0
    %215 = vmatpush1.msra.mxu0 %v101
    %216 = vmatprep.subr.mxu0 0.0
    %217 = vmatpush1.msra.mxu0 %v102
    %218 = vmatprep.subr.mxu0 0.0
    %219 = vmatpush1.msra.mxu0 %v103
    %220 = vmatprep.subr.mxu0 0.0
    %221 = vmatpush1.msra.mxu0 %v104
    %222 = vmatprep.subr.mxu0 0.0
    %223 = vmatpush1.msra.mxu0 %v105
    %224 = vmatprep.subr.mxu0 0.0
    %225 = vmatpush1.msra.mxu0 %v106
    %226 = vmatprep.subr.mxu0 0.0
    %227 = vmatpush1.msra.mxu0 %v107
    %228 = vmatprep.subr.mxu0 0.0
    %229 = vmatpush1.msra.mxu0 %v108
    %230 = vmatprep.subr.mxu0 0.0
    %231 = vmatpush1.msra.mxu0 %v109
    %232 = vmatprep.subr.mxu0 0.0
    %233 = vmatpush1.msra.mxu0 %v110
    %234 = vmatprep.subr.mxu0 0.0
    %235 = vmatpush1.msra.mxu0 %v111
    %236 = vmatprep.subr.mxu0 0.0
    %237 = vmatpush1.msra.mxu0 %v112
    %238 = vmatprep.subr.mxu0 0.0
    %239 = vmatpush1.msra.mxu0 0.0
    %240 = vmatprep.subr.mxu0 0.0
    %241 = vmatpush1.msra.mxu0 0.0
    %242 = vmatprep.subr.mxu0 0.0
    %243 = vmatpush1.msra.mxu0 0.0
    %244 = vmatprep.subr.mxu0 0.0
    %245 = vmatpush1.msra.mxu0 0.0
    %246 = vmatprep.subr.mxu0 0.0
    %247 = vmatpush1.msra.mxu0 0.0
    %248 = vmatprep.subr.mxu0 0.0
    %249 = vmatpush1.msra.mxu0 0.0
    %250 = vmatprep.subr.mxu0 0.0
    %251 = vmatpush1.msra.mxu0 0.0
    %252 = vmatprep.subr.mxu0 0.0
    %253 = vmatpush1.msra.mxu0 0.0
    %254 = vmatprep.subr.mxu0 0.0
    %255 = vmatpush1.msra.mxu0 0.0
    %256 = vmatprep.subr.mxu0 0.0
    %257 = vmatpush1.msra.mxu0 0.0
    %258 = vmatprep.subr.mxu0 0.0
    %259 = vmatpush1.msra.mxu0 0.0
    %260 = vmatprep.subr.mxu0 0.0
    %261 = vmatpush1.msra.mxu0 0.0
    %262 = vmatprep.subr.mxu0 0.0
    %263 = vmatpush1.msra.mxu0 0.0
    %264 = vmatprep.subr.mxu0 0.0
    %265 = vmatpush1.msra.mxu0 0.0
    %266 = vmatprep.subr.mxu0 0.0
    %267 = vmatpush1.msra.mxu0 0.0
    %268 = vmatprep.subr.mxu0 0.0
    %269 = vmatpush1.msra.mxu0 0.0
    %270 = vmatprep.mubr.f32.mxu0 0.0
    %271 = vmatmul.mubr.f32.gmra.mrb[0].mxu0 %v95
    %v272 = vpop.f32.mrb[0].mxu0
    %v273 = vadd.f32 %v198, %v272
    %v274 = vpop.f32.mrb[0].mxu0
    %275 = vmatprep.mubr.f32.mxu0 0.0
    %276 = vmatmul.mubr.f32.gmra.mrb[0].mxu0 %v96
    %v277 = vpop.f32.mrb[0].mxu0
    %v278 = vadd.f32 %v203, %v277
    %v279 = vpop.f32.mrb[0].mxu0
    %280 = vdwg.mxu0
    %v281 = vld [vmem:[%s4] sm:$0x1]
    %v283 = vlaneseq
    %v284 = vshrl.u32 %v283, 7
    %v285 = vsub.s32 0, %v284
    %v286 = vrot.slane %v281, %v285
    %v288 = vadd.f32 %v273, %v286
    %v289 = vadd.f32 %v278, %v286
    %v290 = vmax.f32 %v288, 0.0
    %v291 = vmax.f32 %v289, 0.0
    %v292 = vld [vmem:[#allocation10] sm:$0xff]
    %v293 = vld [vmem:[#allocation10 + $0x8] sm:$0xff]
    %v294 = vld [vmem:[#allocation10 + $0x10] sm:$0xff]
    %v295 = vld [vmem:[#allocation10 + $0x18] sm:$0xff]
    %v296 = vld [vmem:[#allocation10 + $0x20] sm:$0xff]
    %v297 = vld [vmem:[#allocation10 + $0x28] sm:$0xff]
    %v298 = vld [vmem:[#allocation10 + $0x30] sm:$0xff]
    %v299 = vld [vmem:[#allocation10 + $0x38] sm:$0xff]
    %v300 = vld [vmem:[#allocation10 + $0x40] sm:$0xff]
    %v301 = vld [vmem:[#allocation10 + $0x48] sm:$0xff]
    %v302 = vld [vmem:[#allocation10 + $0x50] sm:$0xff]
    %v303 = vld [vmem:[#allocation10 + $0x58] sm:$0xff]
    %v304 = vld [vmem:[#allocation10 + $0x60] sm:$0xff]
    %v305 = vld [vmem:[#allocation10 + $0x68] sm:$0xff]
    %v306 = vld [vmem:[#allocation10 + $0x70] sm:$0xff]
    %v307 = vld [vmem:[#allocation10 + $0x78] sm:$0xff]
    %v308 = vld [vmem:[%s6] sm:$0x1]
    %v310 = vlaneseq
    %v311 = vshrl.u32 %v310, 7
    %v312 = vsub.s32 0, %v311
    %v313 = vrot.slane %v308, %v312
    %315 = vmatprep.subr.mxu0 0.0
    %316 = vmatpush1.msra.mxu0 %v292
    %317 = vmatprep.subr.mxu0 0.0
    %318 = vmatpush1.msra.mxu0 %v293
    %319 = vmatprep.subr.mxu0 0.0
    %320 = vmatpush1.msra.mxu0 %v294
    %321 = vmatprep.subr.mxu0 0.0
    %322 = vmatpush1.msra.mxu0 %v295
    %323 = vmatprep.subr.mxu0 0.0
    %324 = vmatpush1.msra.mxu0 %v296
    %325 = vmatprep.subr.mxu0 0.0
    %326 = vmatpush1.msra.mxu0 %v297
    %327 = vmatprep.subr.mxu0 0.0
    %328 = vmatpush1.msra.mxu0 %v298
    %329 = vmatprep.subr.mxu0 0.0
    %330 = vmatpush1.msra.mxu0 %v299
    %331 = vmatprep.subr.mxu0 0.0
    %332 = vmatpush1.msra.mxu0 %v300
    %333 = vmatprep.subr.mxu0 0.0
    %334 = vmatpush1.msra.mxu0 %v301
    %335 = vmatprep.subr.mxu0 0.0
    %336 = vmatpush1.msra.mxu0 %v302
    %337 = vmatprep.subr.mxu0 0.0
    %338 = vmatpush1.msra.mxu0 %v303
    %339 = vmatprep.subr.mxu0 0.0
    %340 = vmatpush1.msra.mxu0 %v304
    %341 = vmatprep.subr.mxu0 0.0
    %342 = vmatpush1.msra.mxu0 %v305
    %343 = vmatprep.subr.mxu0 0.0
    %344 = vmatpush1.msra.mxu0 %v306
    %345 = vmatprep.subr.mxu0 0.0
    %346 = vmatpush1.msra.mxu0 %v307
    %347 = vmatprep.subr.mxu0 0.0
    %348 = vmatpush1.msra.mxu0 0.0
    %349 = vmatprep.subr.mxu0 0.0
    %350 = vmatpush1.msra.mxu0 0.0
    %351 = vmatprep.subr.mxu0 0.0
    %352 = vmatpush1.msra.mxu0 0.0
    %353 = vmatprep.subr.mxu0 0.0
    %354 = vmatpush1.msra.mxu0 0.0
    %355 = vmatprep.subr.mxu0 0.0
    %356 = vmatpush1.msra.mxu0 0.0
    %357 = vmatprep.subr.mxu0 0.0
    %358 = vmatpush1.msra.mxu0 0.0
    %359 = vmatprep.subr.mxu0 0.0
    %360 = vmatpush1.msra.mxu0 0.0
    %361 = vmatprep.subr.mxu0 0.0
    %362 = vmatpush1.msra.mxu0 0.0
    %363 = vmatprep.subr.mxu0 0.0
    %364 = vmatpush1.msra.mxu0 0.0
    %365 = vmatprep.subr.mxu0 0.0
    %366 = vmatpush1.msra.mxu0 0.0
    %367 = vmatprep.subr.mxu0 0.0
    %368 = vmatpush1.msra.mxu0 0.0
    %369 = vmatprep.subr.mxu0 0.0
    %370 = vmatpush1.msra.mxu0 0.0
    %371 = vmatprep.subr.mxu0 0.0
    %372 = vmatpush1.msra.mxu0 0.0
    %373 = vmatprep.subr.mxu0 0.0
    %374 = vmatpush1.msra.mxu0 0.0
    %375 = vmatprep.subr.mxu0 0.0
    %376 = vmatpush1.msra.mxu0 0.0
    %377 = vmatprep.subr.mxu0 0.0
    %378 = vmatpush1.msra.mxu0 0.0
    %379 = vmatprep.mubr.f32.mxu0 0.0
    %380 = vmatmul.mubr.f32.gmra.mrb[0].mxu0 %v290
    %v381 = vpop.f32.mrb[0].mxu0
    %v382 = vadd.f32 %v313, %v381
    %v383 = vpop.f32.mrb[0].mxu0
    %384 = vmatprep.mubr.f32.mxu0 0.0
    %385 = vmatmul.mubr.f32.gmra.mrb[0].mxu0 %v291
    %v386 = vpop.f32.mrb[0].mxu0
    %v387 = vadd.f32 %v313, %v386
    %v388 = vpop.f32.mrb[0].mxu0
    %389 = vdwg.mxu0
    %390 = vst [vmem:[#allocation11] sm:$0xff] %v382
    %391 = vst [vmem:[#allocation11 + $0x8] sm:$0xff] %v387
    // Predicated region
    $region50: #{tpu_custom_call.1} parent=1 // pred_check
      _
    $region51: #{tpu_custom_call.1} parent=1 // pred_check_branch
      %393 = sbr.rel (0) target = $region53
    $region52: #{tpu_custom_call.1} parent=1 // pred_region
      %s395 = ssub.s32 256, 256
      %396 = vsyncadd [#allocation4], %s395
      %s397 = sshll.u32 [#allocation11], 4
      %s398 = int_to_ptr.vmem [resolvable:$true] %s397
      %403 = dma.vmem_to_hbm [thread:$0]  %s398, 256, %s7, [#allocation4], 128, 128, 8
    $region53: #{tpu_custom_call.1} parent=1 // pred_fallthru
      _
    // Predicated region
    $region54: #{tpu_custom_call.1} parent=1 // pred_check
      _
    $region55: #{tpu_custom_call.1} parent=1 // pred_check_branch
      %405 = sbr.rel (0) target = $region57
    $region56: #{tpu_custom_call.1} parent=1 // pred_region
      %406 = dma.done [#allocation4], 256
    $region57: #{tpu_custom_call.1} parent=1 // pred_fallthru
      _
    %407 = vsyncpa [#allocation3], 1
    %408 = vsyncpa [#allocation6], 1
    %409 = vsyncpa [#allocation9], 1
    %410 = vsyncpa [#allocation4], 1

</llo_original>
